<compile_context>
chip_gen: v6e
topology: v6e:2x2x1
jax: 0.10.0
libtpu: 0.0.40
codegen_flags: <defaults>
</compile_context>

<pallas_src>
import functools

import jax
import jax.numpy as jnp
from jax.experimental import pallas as pl
from jax.experimental.pallas import tpu as pltpu


def dqn_kernel(x_ref, w1_ref, b1_ref, w2_ref, b2_ref, out_ref, *, compute_dtype):
    # Hidden layer: Linear(state_dim -> 64) + ReLU. Cast to the compute dtype
    # in-kernel (free VPU op on VMEM-resident data), accumulate in f32 on MXU.
    x = x_ref[...].astype(compute_dtype)
    w1 = w1_ref[...].astype(compute_dtype)
    h = jnp.dot(x, w1, preferred_element_type=jnp.float32)
    h = jnp.maximum(h + b1_ref[...], 0.0)            # (TB, 64) + (1, 64), ReLU on VPU
    # Output layer: Linear(64 -> action_dim), narrow result, f32 accumulation.
    q = jnp.dot(h.astype(compute_dtype), w2_ref[...].astype(compute_dtype),
                preferred_element_type=jnp.float32)
    out_ref[...] = (q + b2_ref[...]).astype(out_ref.dtype)


def _round_up(x, m):
    return ((x + m - 1) // m) * m


def dqn_forward(x, w1, b1, w2, b2, *, block_b=4096, compute_dtype=jnp.float32):
    """Forward pass of DQN: relu(x @ w1 + b1) @ w2 + b2.

    x:  (B, state_dim) float32
    w1: (state_dim, 64), b1: (1, 64)
    w2: (64, action_dim), b2: (1, action_dim)   -- all float32, cast in-kernel
    compute_dtype: jnp.float32 (exact PyTorch semantics) or jnp.bfloat16
      (MXU-friendly low-precision path; biases/accumulation stay f32).
    returns: (B, action_dim) float32
    """
    B, state_dim = x.shape
    hidden = w1.shape[1]
    action_dim = w2.shape[1]

    # --- Batch tiling ---------------------------------------------------------
    # TB is a multiple of 8 sublanes, capped near ceil(B/2) so the "parallel"
    # batch axis has >= 2 grid steps (keeps both v7x TensorCores busy) whenever
    # B > 8.  No jnp.pad: the grid uses cdiv and the ragged boundary block's
    # out-of-bounds output rows are masked on store.
    block_b = max(8, _round_up(block_b, 8))
    half_b = max(8, _round_up((B + 1) // 2, 8))
    tb = min(block_b, half_b)
    grid = (pl.cdiv(B, tb),)

    # VMEM budget per grid step (double-buffered x + out, resident weights):
    #   2*tb*state_dim*4 + 2*tb*action_dim*4 + weights  ->  ~1 MB at tb=4096
    #   for these shapes; well inside the 16/32 MiB scoped defaults.

    b1c = b1.astype(jnp.float32)
    b2c = b2.astype(jnp.float32)

    flops = 2 * B * (state_dim * hidden + hidden * action_dim)
    bytes_accessed = (B * state_dim * 4                     # x in (f32)
                      + state_dim * hidden * 4              # w1
                      + hidden * action_dim * 4             # w2
                      + (hidden + action_dim) * 4           # biases
                      + B * action_dim * 4)                 # out (narrow, f32)

    kernel = functools.partial(dqn_kernel, compute_dtype=compute_dtype)

    out = pl.pallas_call(
        kernel,
        out_shape=jax.ShapeDtypeStruct((B, action_dim), jnp.float32),
        grid=grid,
        in_specs=[
            pl.BlockSpec((tb, state_dim), lambda i: (i, 0)),       # x: batch-tiled
            pl.BlockSpec((state_dim, hidden), lambda i: (0, 0)),   # w1: resident
            pl.BlockSpec((1, hidden), lambda i: (0, 0)),           # b1: resident
            pl.BlockSpec((hidden, action_dim), lambda i: (0, 0)),  # w2: resident
            pl.BlockSpec((1, action_dim), lambda i: (0, 0)),       # b2: resident
        ],
        out_specs=pl.BlockSpec((tb, action_dim), lambda i: (i, 0)),
        compiler_params=pltpu.CompilerParams(
            dimension_semantics=("parallel",)),   # shard batch across TCs on v7x
        cost_estimate=pl.CostEstimate(
            flops=flops, transcendentals=0, bytes_accessed=bytes_accessed),
    )(x, w1, b1c, w2, b2c)

    return out


def init_dqn_params(key, state_dim, action_dim, hidden=64):
    """Deterministic init mimicking PyTorch nn.Linear default:
    U(-1/sqrt(fan_in), 1/sqrt(fan_in)) for both weights and biases."""
    k1, k2, k3, k4 = jax.random.split(key, 4)
    bound1 = 1.0 / jnp.sqrt(jnp.float32(state_dim))
    bound2 = 1.0 / jnp.sqrt(jnp.float32(hidden))
    w1 = jax.random.uniform(k1, (state_dim, hidden), jnp.float32, -bound1, bound1)
    b1 = jax.random.uniform(k2, (1, hidden), jnp.float32, -bound1, bound1)
    w2 = jax.random.uniform(k3, (hidden, action_dim), jnp.float32, -bound2, bound2)
    b2 = jax.random.uniform(k4, (1, action_dim), jnp.float32, -bound2, bound2)
    return w1, b1, w2, b2


def _reference(x, w1, b1, w2, b2, dtype=jnp.float32):
    """Pure-JAX reference with the same compute-dtype semantics as the kernel."""
    h = jnp.dot(x.astype(dtype), w1.astype(dtype),
                preferred_element_type=jnp.float32) + b1
    h = jnp.maximum(h, 0.0)
    q = jnp.dot(h.astype(dtype), w2.astype(dtype),
                preferred_element_type=jnp.float32) + b2
    return q


if __name__ == "__main__":
    key = jax.random.PRNGKey(0)
    k_x, k_p, k_x2 = jax.random.split(key, 3)

    # Small shapes consistent with the module's forward (CartPole-like).
    batch, state_dim, action_dim = 8, 16, 4
    x = jax.random.normal(k_x, (batch, state_dim), jnp.float32)
    w1, b1, w2, b2 = init_dqn_params(k_p, state_dim, action_dim)

    # 1) f32 path: exact semantics of the PyTorch module (single-block grid).
    out = jax.block_until_ready(dqn_forward(x, w1, b1, w2, b2))
    ref = _reference(x, w1, b1, w2, b2, jnp.float32)
    assert out.shape == (batch, action_dim)
    assert jnp.allclose(out, ref, atol=1e-4, rtol=1e-4)

    # 2) Larger, non-multiple-of-8 batch exercises the ragged cdiv grid
    #    (2 grid steps -> both TCs on v7x) with no wrapper-side padding.
    x_big = jax.random.normal(k_x2, (300, state_dim), jnp.float32)
    out_big = jax.block_until_ready(dqn_forward(x_big, w1, b1, w2, b2))
    ref_big = _reference(x_big, w1, b1, w2, b2, jnp.float32)
    assert out_big.shape == (300, action_dim)
    assert jnp.allclose(out_big, ref_big, atol=1e-4, rtol=1e-4)

    # 3) bf16 compute path (in-kernel cast; usable on v5e/v6e/v7x).
    out_bf16 = jax.block_until_ready(
        dqn_forward(x_big, w1, b1, w2, b2, compute_dtype=jnp.bfloat16))
    ref_bf16 = _reference(x_big, w1, b1, w2, b2, jnp.bfloat16)
    assert out_bf16.shape == (300, action_dim)
    assert jnp.allclose(out_bf16, ref_bf16, atol=2e-2, rtol=2e-2)

    print("KERNEL_OK")
</pallas_src>

<mosaic_0001>
module attributes {stable_mosaic.version = 11 : i64} {
  func.func @dqn_kernel(%arg0: i32, %arg1: memref<8x16xf32, #tpu.memory_space<vmem>>, %arg2: memref<16x64xf32, #tpu.memory_space<vmem>>, %arg3: memref<1x64xf32, #tpu.memory_space<vmem>>, %arg4: memref<64x4xf32, #tpu.memory_space<vmem>>, %arg5: memref<1x4xf32, #tpu.memory_space<vmem>>, %arg6: memref<8x4xf32, #tpu.memory_space<vmem>>) attributes {dimension_semantics = [#tpu.dimension_semantics<parallel>], iteration_bounds = array<i64: 1>, scalar_prefetch = 0 : i64, scratch_operands = 0 : i64, tpu.core_type = #tpu.core_type<tc>, window_params = [{transform_indices = @transform_0, window_bounds = array<i64: 8, 16>}, {pipeline_mode = #tpu.pipeline_mode<synchronous>, transform_indices = @transform_1, window_bounds = array<i64: 16, 64>}, {pipeline_mode = #tpu.pipeline_mode<synchronous>, transform_indices = @transform_2, window_bounds = array<i64: 1, 64>}, {pipeline_mode = #tpu.pipeline_mode<synchronous>, transform_indices = @transform_3, window_bounds = array<i64: 64, 4>}, {pipeline_mode = #tpu.pipeline_mode<synchronous>, transform_indices = @transform_4, window_bounds = array<i64: 1, 4>}, {transform_indices = @transform_5, window_bounds = array<i64: 8, 4>}]} {
    %c0 = arith.constant 0 : index
    %c0_0 = arith.constant 0 : index
    %0 = vector.load %arg1[%c0, %c0_0] : memref<8x16xf32, #tpu.memory_space<vmem>>, vector<8x16xf32>
    %c0_1 = arith.constant 0 : index
    %c0_2 = arith.constant 0 : index
    %1 = vector.load %arg2[%c0_1, %c0_2] : memref<16x64xf32, #tpu.memory_space<vmem>>, vector<16x64xf32>
    %cst = arith.constant dense<0.000000e+00> : vector<8x64xf32>
    %2 = tpu.matmul %0, %1, %cst {dimension_numbers = #tpu.dot_dimension_numbers<[1], [0], [0], [1], [0, 0, 1, 1], [], []>} : vector<8x16xf32>, vector<16x64xf32>, vector<8x64xf32> -> vector<8x64xf32>
    %c0_3 = arith.constant 0 : index
    %c0_4 = arith.constant 0 : index
    %3 = vector.load %arg3[%c0_3, %c0_4] : memref<1x64xf32, #tpu.memory_space<vmem>>, vector<1x64xf32>
    %4 = vector.broadcast %3 : vector<1x64xf32> to vector<8x64xf32>
    %5 = arith.addf %2, %4 : vector<8x64xf32>
    %cst_5 = arith.constant 0.000000e+00 : f32
    %6 = vector.broadcast %cst_5 : f32 to vector<8x64xf32>
    %7 = arith.maximumf %5, %6 : vector<8x64xf32>
    %c0_6 = arith.constant 0 : index
    %c0_7 = arith.constant 0 : index
    %8 = vector.load %arg4[%c0_6, %c0_7] : memref<64x4xf32, #tpu.memory_space<vmem>>, vector<64x4xf32>
    %cst_8 = arith.constant dense<0.000000e+00> : vector<8x4xf32>
    %9 = tpu.matmul %7, %8, %cst_8 {dimension_numbers = #tpu.dot_dimension_numbers<[1], [0], [0], [1], [0, 0, 1, 1], [], []>} : vector<8x64xf32>, vector<64x4xf32>, vector<8x4xf32> -> vector<8x4xf32>
    %c0_9 = arith.constant 0 : index
    %c0_10 = arith.constant 0 : index
    %10 = vector.load %arg5[%c0_9, %c0_10] : memref<1x4xf32, #tpu.memory_space<vmem>>, vector<1x4xf32>
    %11 = vector.broadcast %10 : vector<1x4xf32> to vector<8x4xf32>
    %12 = arith.addf %9, %11 : vector<8x4xf32>
    %c0_11 = arith.constant 0 : index
    %c0_12 = arith.constant 0 : index
    %13 = vector.load %arg6[%c0_11, %c0_12] : memref<8x4xf32, #tpu.memory_space<vmem>>, vector<8x4xf32>
    tpu.vector_store %arg6[%c0_11, %c0_12], %12 {strides = array<i32>} : memref<8x4xf32, #tpu.memory_space<vmem>>, vector<8x4xf32>,
    return
  }
  func.func @transform_0(%arg0: i32) -> (i32, i32) {
    %c0_i32 = arith.constant 0 : i32
    %c0_i32_0 = arith.constant 0 : i32
    return %arg0, %c0_i32 : i32, i32
  }
  func.func @transform_1(%arg0: i32) -> (i32, i32) {
    %c0_i32 = arith.constant 0 : i32
    %c0_i32_0 = arith.constant 0 : i32
    %c0_i32_1 = arith.constant 0 : i32
    return %c0_i32, %c0_i32_0 : i32, i32
  }
  func.func @transform_2(%arg0: i32) -> (i32, i32) {
    %c0_i32 = arith.constant 0 : i32
    %c0_i32_0 = arith.constant 0 : i32
    %c0_i32_1 = arith.constant 0 : i32
    return %c0_i32, %c0_i32_0 : i32, i32
  }
  func.func @transform_3(%arg0: i32) -> (i32, i32) {
    %c0_i32 = arith.constant 0 : i32
    %c0_i32_0 = arith.constant 0 : i32
    %c0_i32_1 = arith.constant 0 : i32
    return %c0_i32, %c0_i32_0 : i32, i32
  }
  func.func @transform_4(%arg0: i32) -> (i32, i32) {
    %c0_i32 = arith.constant 0 : i32
    %c0_i32_0 = arith.constant 0 : i32
    %c0_i32_1 = arith.constant 0 : i32
    return %c0_i32, %c0_i32_0 : i32, i32
  }
  func.func @transform_5(%arg0: i32) -> (i32, i32) {
    %c0_i32 = arith.constant 0 : i32
    %c0_i32_0 = arith.constant 0 : i32
    return %arg0, %c0_i32 : i32, i32
  }
}

</mosaic_0001>

<llo_original>
// kernel: tpu_custom_call.1
$region0: #{tpu_custom_call.1}
  #allocation0 [shape = 'u32[]', space=smem, size = 0x4, offset = 0x4, fixed_abs, tag = 'smem constant byte address 0x4 - core index']
  #allocation1 [shape = 'u32[144,128]{1,0:T(1,128)}', space=vmem, size = 0x12000, scoped, tag = 'internal scratch']
  %s0 = inlined_call_operand.vmem [shape: f32[8,16], index: 0, kind: input, shape index: {}]
  %s1 = inlined_call_operand.vmem [shape: f32[16,64], index: 1, kind: input, shape index: {}]
  %s2 = inlined_call_operand.vmem [shape: f32[1,64], index: 2, kind: input, shape index: {}]
  %s3 = inlined_call_operand.vmem [shape: f32[64,4], index: 3, kind: input, shape index: {}]
  %s4 = inlined_call_operand.vmem [shape: f32[1,4], index: 4, kind: input, shape index: {}]
  %s5 = inlined_call_operand.vmem [shape: f32[8,4], index: 5, kind: output, shape index: {}]
  %s6 = sld [smem:[#allocation0]]
  $region30: #{tpu_custom_call.1} parent=0
    _
  %s8 = ssub.s32 1, %s6
  %s9 = scalar_select 0, %s8, %s6
  // Predicated region
  $region2: #{tpu_custom_call.1} parent=0 // pred_check
    _
  $region3: #{tpu_custom_call.1} parent=0 // pred_check_branch
    %11 = sbr.rel (0) target = $region5
  $region4: #{tpu_custom_call.1} parent=0 // pred_region
    _
  $region5: #{tpu_custom_call.1} parent=0 // pred_fallthru
    _
  // Predicated region
  $region6: #{tpu_custom_call.1} parent=0 // pred_check
    _
  $region7: #{tpu_custom_call.1} parent=0 // pred_check_branch
    %13 = sbr.rel (0) target = $region9
  $region8: #{tpu_custom_call.1} parent=0 // pred_region
    _
  $region9: #{tpu_custom_call.1} parent=0 // pred_fallthru
    _
  // Predicated region
  $region10: #{tpu_custom_call.1} parent=0 // pred_check
    _
  $region11: #{tpu_custom_call.1} parent=0 // pred_check_branch
    %15 = sbr.rel (0) target = $region13
  $region12: #{tpu_custom_call.1} parent=0 // pred_region
    _
  $region13: #{tpu_custom_call.1} parent=0 // pred_fallthru
    _
  // Predicated region
  $region14: #{tpu_custom_call.1} parent=0 // pred_check
    _
  $region15: #{tpu_custom_call.1} parent=0 // pred_check_branch
    %17 = sbr.rel (0) target = $region17
  $region16: #{tpu_custom_call.1} parent=0 // pred_region
    _
  $region17: #{tpu_custom_call.1} parent=0 // pred_fallthru
    _
  // Predicated region
  $region18: #{tpu_custom_call.1} parent=0 // pred_check
    _
  $region19: #{tpu_custom_call.1} parent=0 // pred_check_branch
    %19 = sbr.rel (0) target = $region21
  $region20: #{tpu_custom_call.1} parent=0 // pred_region
    _
  $region21: #{tpu_custom_call.1} parent=0 // pred_fallthru
    _
  %v20 = vld [vmem:[%s0] sm:$0xff]
  %v21 = vld [vmem:[%s1] sm:$0xff]
  %v22 = vld [vmem:[%s1 + $0x8] sm:$0xff]
  %v23 = vld [vmem:[%s2] sm:$0x1]
  %v25 = vlaneseq
  %v26 = vshrl.u32 %v25, 7
  %v27 = vsub.s32 0, %v26
  %v28 = vrot.slane %v23, %v27
  %vm30 = vcmask 130048
  %v32 = vsel %vm30, %v20, 0
  %34 = vmatprep.subr.mxu0 0.0
  %35 = vmatpush1.msra.mxu0 0.0
  %36 = vmatprep.subr.mxu0 0.0
  %37 = vmatpush1.msra.mxu0 0.0
  %38 = vmatprep.subr.mxu0 0.0
  %39 = vmatpush1.msra.mxu0 0.0
  %40 = vmatprep.subr.mxu0 0.0
  %41 = vmatpush1.msra.mxu0 0.0
  %42 = vmatprep.subr.mxu0 0.0
  %43 = vmatpush1.msra.mxu0 0.0
  %44 = vmatprep.subr.mxu0 0.0
  %45 = vmatpush1.msra.mxu0 0.0
  %46 = vmatprep.subr.mxu0 0.0
  %47 = vmatpush1.msra.mxu0 0.0
  %48 = vmatprep.subr.mxu0 0.0
  %49 = vmatpush1.msra.mxu0 0.0
  %50 = vmatprep.subr.mxu0 0.0
  %51 = vmatpush1.msra.mxu0 0.0
  %52 = vmatprep.subr.mxu0 0.0
  %53 = vmatpush1.msra.mxu0 0.0
  %54 = vmatprep.subr.mxu0 0.0
  %55 = vmatpush1.msra.mxu0 0.0
  %56 = vmatprep.subr.mxu0 0.0
  %57 = vmatpush1.msra.mxu0 0.0
  %58 = vmatprep.subr.mxu0 0.0
  %59 = vmatpush1.msra.mxu0 0.0
  %60 = vmatprep.subr.mxu0 0.0
  %61 = vmatpush1.msra.mxu0 0.0
  %62 = vmatprep.subr.mxu0 0.0
  %63 = vmatpush1.msra.mxu0 %v22
  %64 = vmatprep.subr.mxu0 0.0
  %65 = vmatpush1.msra.mxu0 %v21
  %66 = vmatprep.subr.mxu0 0.0
  %67 = vmatpush2.msra.mxu0 0.0
  %68 = vmatprep.subr.mxu0 0.0
  %69 = vmatpush2.msra.mxu0 0.0
  %70 = vmatprep.subr.mxu0 0.0
  %71 = vmatpush2.msra.mxu0 0.0
  %72 = vmatprep.subr.mxu0 0.0
  %73 = vmatpush2.msra.mxu0 0.0
  %74 = vmatprep.subr.mxu0 0.0
  %75 = vmatpush2.msra.mxu0 0.0
  %76 = vmatprep.subr.mxu0 0.0
  %77 = vmatpush2.msra.mxu0 0.0
  %78 = vmatprep.subr.mxu0 0.0
  %79 = vmatpush2.msra.mxu0 0.0
  %80 = vmatprep.subr.mxu0 0.0
  %81 = vmatpush2.msra.mxu0 0.0
  %82 = vmatprep.subr.mxu0 0.0
  %83 = vmatpush2.msra.mxu0 0.0
  %84 = vmatprep.subr.mxu0 0.0
  %85 = vmatpush2.msra.mxu0 0.0
  %86 = vmatprep.subr.mxu0 0.0
  %87 = vmatpush2.msra.mxu0 0.0
  %88 = vmatprep.subr.mxu0 0.0
  %89 = vmatpush2.msra.mxu0 0.0
  %90 = vmatprep.subr.mxu0 0.0
  %91 = vmatpush2.msra.mxu0 0.0
  %92 = vmatprep.subr.mxu0 0.0
  %93 = vmatpush2.msra.mxu0 0.0
  %94 = vmatprep.subr.mxu0 0.0
  %95 = vmatpush2.msra.mxu0 0.0
  %96 = vmatprep.subr.mxu0 0.0
  %97 = vmatpush2.msra.mxu0 0.0
  %98 = vmatprep.mubr.f32.mxu0 0.0
  %99 = vmatmul.mubr.f32.gmra.mxu0 %v32
  %v100 = vpop.f32.mrf.mxu0
  %v101 = vadd.f32 %v28, %v100
  %v102 = vpop.f32.mrf.mxu0
  %103 = vdwg.mxu0
  %v104 = vmax.f32 %v101, 0.0
  %v105 = vld [vmem:[%s3] sm:$0xff]
  %v106 = vld [vmem:[%s3 + $0x8] sm:$0xff]
  %v107 = vld [vmem:[%s3 + $0x10] sm:$0xff]
  %v108 = vld [vmem:[%s3 + $0x18] sm:$0xff]
  %v109 = vld [vmem:[%s3 + $0x20] sm:$0xff]
  %v110 = vld [vmem:[%s3 + $0x28] sm:$0xff]
  %v111 = vld [vmem:[%s3 + $0x30] sm:$0xff]
  %v112 = vld [vmem:[%s3 + $0x38] sm:$0xff]
  %v113 = vld [vmem:[%s4] sm:$0x1]
  %v115 = vlaneseq
  %v116 = vshrl.u32 %v115, 7
  %v117 = vsub.s32 0, %v116
  %v118 = vrot.slane %v113, %v117
  %vm120 = vcmask 523264
  %v122 = vsel %vm120, %v104, 0
  %124 = vmatprep.subr.mxu0 0.0
  %125 = vmatpush1.msra.mxu0 0.0
  %126 = vmatprep.subr.mxu0 0.0
  %127 = vmatpush1.msra.mxu0 0.0
  %128 = vmatprep.subr.mxu0 0.0
  %129 = vmatpush1.msra.mxu0 0.0
  %130 = vmatprep.subr.mxu0 0.0
  %131 = vmatpush1.msra.mxu0 0.0
  %132 = vmatprep.subr.mxu0 0.0
  %133 = vmatpush1.msra.mxu0 0.0
  %134 = vmatprep.subr.mxu0 0.0
  %135 = vmatpush1.msra.mxu0 0.0
  %136 = vmatprep.subr.mxu0 0.0
  %137 = vmatpush1.msra.mxu0 0.0
  %138 = vmatprep.subr.mxu0 0.0
  %139 = vmatpush1.msra.mxu0 0.0
  %140 = vmatprep.subr.mxu0 0.0
  %141 = vmatpush1.msra.mxu0 %v112
  %142 = vmatprep.subr.mxu0 0.0
  %143 = vmatpush1.msra.mxu0 %v111
  %144 = vmatprep.subr.mxu0 0.0
  %145 = vmatpush1.msra.mxu0 %v110
  %146 = vmatprep.subr.mxu0 0.0
  %147 = vmatpush1.msra.mxu0 %v109
  %148 = vmatprep.subr.mxu0 0.0
  %149 = vmatpush1.msra.mxu0 %v108
  %150 = vmatprep.subr.mxu0 0.0
  %151 = vmatpush1.msra.mxu0 %v107
  %152 = vmatprep.subr.mxu0 0.0
  %153 = vmatpush1.msra.mxu0 %v106
  %154 = vmatprep.subr.mxu0 0.0
  %155 = vmatpush1.msra.mxu0 %v105
  %156 = vmatprep.subr.mxu0 0.0
  %157 = vmatpush2.msra.mxu0 0.0
  %158 = vmatprep.subr.mxu0 0.0
  %159 = vmatpush2.msra.mxu0 0.0
  %160 = vmatprep.subr.mxu0 0.0
  %161 = vmatpush2.msra.mxu0 0.0
  %162 = vmatprep.subr.mxu0 0.0
  %163 = vmatpush2.msra.mxu0 0.0
  %164 = vmatprep.subr.mxu0 0.0
  %165 = vmatpush2.msra.mxu0 0.0
  %166 = vmatprep.subr.mxu0 0.0
  %167 = vmatpush2.msra.mxu0 0.0
  %168 = vmatprep.subr.mxu0 0.0
  %169 = vmatpush2.msra.mxu0 0.0
  %170 = vmatprep.subr.mxu0 0.0
  %171 = vmatpush2.msra.mxu0 0.0
  %172 = vmatprep.subr.mxu0 0.0
  %173 = vmatpush2.msra.mxu0 0.0
  %174 = vmatprep.subr.mxu0 0.0
  %175 = vmatpush2.msra.mxu0 0.0
  %176 = vmatprep.subr.mxu0 0.0
  %177 = vmatpush2.msra.mxu0 0.0
  %178 = vmatprep.subr.mxu0 0.0
  %179 = vmatpush2.msra.mxu0 0.0
  %180 = vmatprep.subr.mxu0 0.0
  %181 = vmatpush2.msra.mxu0 0.0
  %182 = vmatprep.subr.mxu0 0.0
  %183 = vmatpush2.msra.mxu0 0.0
  %184 = vmatprep.subr.mxu0 0.0
  %185 = vmatpush2.msra.mxu0 0.0
  %186 = vmatprep.subr.mxu0 0.0
  %187 = vmatpush2.msra.mxu0 0.0
  %188 = vmatprep.mubr.f32.mxu0 0.0
  %189 = vmatmul.mubr.f32.gmra.mxu0 %v122
  %v190 = vpop.f32.mrf.mxu0
  %v191 = vadd.f32 %v118, %v190
  %v192 = vpop.f32.mrf.mxu0
  %193 = vdwg.mxu0
  %vm194 = vcmask 31744
  %195 = vst.msk [vmem:[%s5] sm:$0xff] %vm194, %v191
  // Predicated region
  $region22: #{tpu_custom_call.1} parent=0 // pred_check
    _
  $region23: #{tpu_custom_call.1} parent=0 // pred_check_branch
    %197 = sbr.rel (0) target = $region25
  $region24: #{tpu_custom_call.1} parent=0 // pred_region
    _
  $region25: #{tpu_custom_call.1} parent=0 // pred_fallthru
    _
  // Predicated region
  $region26: #{tpu_custom_call.1} parent=0 // pred_check
    _
  $region27: #{tpu_custom_call.1} parent=0 // pred_check_branch
    %199 = sbr.rel (0) target = $region29
  $region28: #{tpu_custom_call.1} parent=0 // pred_region
    _
  $region29: #{tpu_custom_call.1} parent=0 // pred_fallthru
    _

</llo_original>
